<compile_context>
chip_gen: v7x
topology: tpu7x:2x2x1
jax: 0.10.0
libtpu: 0.0.40
codegen_flags: <defaults>
</compile_context>

<pallas_src>
import jax
import jax.numpy as jnp
from jax import lax
from jax.experimental import pallas as pl
from jax.experimental.pallas import tpu as pltpu


def _round_up(x: int, m: int) -> int:
    return ((x + m - 1) // m) * m


# ----------------------------------------------------------------------------
# Path 1: small vocab — resident table + one-hot matmul, no scratch.
# ----------------------------------------------------------------------------
def _onehot_embed_kernel(tok_ref, tbl_ref, out_ref):
    tb = tok_ref.shape[0]
    v = tbl_ref.shape[0]

    tok = tok_ref[...]                                        # (TB, 1) int32
    v_ids = lax.broadcasted_iota(jnp.int32, (tb, v), 1)       # (TB, V), j-independent
    one_hot = (tok == v_ids).astype(tbl_ref.dtype)            # exactly one 1.0 per row

    # HIGHEST keeps fp32 rows bit-exact (one-hot entries are exact); this path
    # is only taken for tiny vocabs so the extra MXU passes are negligible.
    out_ref[...] = jnp.dot(
        one_hot,
        tbl_ref[...],
        preferred_element_type=jnp.float32,
        precision=lax.Precision.HIGHEST,
    ).astype(out_ref.dtype)


# ----------------------------------------------------------------------------
# Path 2: large vocab — scalar-prefetched ids + per-row DMA gather from HBM.
# ----------------------------------------------------------------------------
def _gather_embed_kernel(ids_ref, tbl_ref, out_ref, sem_ref):
    # ids_ref : SMEM (N_pad,) int32   (scalar prefetch, whole array)
    # tbl_ref : HBM  (V, E)           (memory_space=pl.ANY, no auto-DMA)
    # out_ref : VMEM (TB, E)          (pipelined output block for token block i)
    # sem_ref : DMA semaphore, shape (1,)
    i = pl.program_id(0)
    tb = out_ref.shape[0]
    base = i * tb

    def issue(r, carry):
        tok = ids_ref[base + r]
        pltpu.make_async_copy(
            tbl_ref.at[pl.ds(tok, 1)],      # (1, E) row in HBM
            out_ref.at[pl.ds(r, 1)],        # (1, E) row of the VMEM out block
            sem_ref.at[0],
        ).start()
        return carry

    lax.fori_loop(0, tb, issue, 0)

    def drain(r, carry):
        # Same-sized descriptor; only the semaphore / byte-count matter for wait.
        pltpu.make_async_copy(
            tbl_ref.at[pl.ds(0, 1)],
            out_ref.at[pl.ds(0, 1)],
            sem_ref.at[0],
        ).wait()
        return carry

    lax.fori_loop(0, tb, drain, 0)


# ----------------------------------------------------------------------------
# Wrapper
# ----------------------------------------------------------------------------
def token_embedding(
    tokens: jax.Array,
    table: jax.Array,
    *,
    tb_max: int = 128,
    out_block_budget_bytes: int = 2 << 20,     # per-buffer output block budget
    onehot_max_vocab: int = 2048,
    onehot_max_table_bytes: int = 2 << 20,
) -> jax.Array:
    """Pallas equivalent of nn.Embedding(vocab, emb)(tokens)."""
    V, E = table.shape
    out_dtype = table.dtype
    itemsize = jnp.dtype(out_dtype).itemsize

    # NOTE: nn.Embedding raises on out-of-range ids; we clamp instead (also
    # keeps padded ids valid and the DMA bounds-checker happy).
    tok_flat = jnp.clip(tokens.reshape(-1).astype(jnp.int32), 0, V - 1)
    N = tok_flat.shape[0]

    # Token-block size: sublane-dense (multiple of 8), capped by tb_max and by
    # the output-block VMEM budget (keeps large-E configs inside v7x's VMEM).
    tb_fit = max(8, (out_block_budget_bytes // (E * itemsize)) // 8 * 8)
    TB = min(tb_max, tb_fit, _round_up(N, 8))
    # v7x megacore: keep >=2 parallel token blocks when there is enough work.
    if N > 8 and _round_up(N, TB) // TB < 2:
        TB = min(TB, max(8, _round_up((N + 1) // 2, 8)))
    N_pad = _round_up(N, TB)

    tok_pad = jnp.pad(tok_flat, (0, N_pad - N))       # pad id 0 (valid row)
    grid = (N_pad // TB,)

    use_onehot = (V <= onehot_max_vocab) and (V * E * itemsize <= onehot_max_table_bytes)

    if use_onehot:
        tok_col = tok_pad.reshape(N_pad, 1)
        out_flat = pl.pallas_call(
            _onehot_embed_kernel,
            out_shape=jax.ShapeDtypeStruct((N_pad, E), out_dtype),
            grid_spec=pltpu.PrefetchScalarGridSpec(
                num_scalar_prefetch=0,
                grid=grid,
                in_specs=[
                    pl.BlockSpec((TB, 1), lambda i: (i, 0)),   # token ids block
                    pl.BlockSpec((V, E), lambda i: (0, 0)),    # whole table, resident
                ],
                out_specs=pl.BlockSpec((TB, E), lambda i: (i, 0)),
            ),
            compiler_params=pltpu.CompilerParams(
                dimension_semantics=("parallel",),
            ),
        )(tok_col, table)
    else:
        # TODO(synk): for extremely long sequences the flat id array may exceed
        # SMEM; block the ids as well in that case.
        out_flat = pl.pallas_call(
            _gather_embed_kernel,
            out_shape=jax.ShapeDtypeStruct((N_pad, E), out_dtype),
            grid_spec=pltpu.PrefetchScalarGridSpec(
                num_scalar_prefetch=1,                          # ids -> SMEM
                grid=grid,
                in_specs=[pl.BlockSpec(memory_space=pl.ANY)],   # table stays in HBM
                out_specs=pl.BlockSpec((TB, E), lambda i, ids: (i, 0)),
                scratch_shapes=[pltpu.SemaphoreType.DMA((1,))],
            ),
            compiler_params=pltpu.CompilerParams(
                dimension_semantics=("parallel",),
            ),
        )(tok_pad, table)

    return out_flat[:N].reshape(tokens.shape + (E,))


# ----------------------------------------------------------------------------
# Self-test
# ----------------------------------------------------------------------------
if __name__ == "__main__":
    key = jax.random.PRNGKey(0)
    k1, k2, k3, k4 = jax.random.split(key, 4)

    # ---- Test 1: small vocab (one-hot MXU path), module-like small shapes ----
    V1, E1, B1, T1 = 64, 128, 2, 8
    table1 = jax.random.normal(k1, (V1, E1), dtype=jnp.float32)   # nn.Embedding ~ N(0,1)
    tokens1 = jax.random.randint(k2, (B1, T1), 0, V1, dtype=jnp.int32)

    out1 = jax.block_until_ready(token_embedding(tokens1, table1))
    ref1 = jnp.take(table1, tokens1, axis=0)
    assert out1.shape == (B1, T1, E1)
    assert jnp.allclose(out1, ref1, rtol=0.0, atol=1e-6), "one-hot path mismatch"

    # ---- Test 2: larger vocab -> DMA gather path (multi token block) ----
    V2, E2, B2, T2 = 4096, 256, 4, 32
    table2 = jax.random.normal(k3, (V2, E2), dtype=jnp.float32)
    tokens2 = jax.random.randint(k4, (B2, T2), 0, V2, dtype=jnp.int32)

    out2 = jax.block_until_ready(token_embedding(tokens2, table2))
    ref2 = jnp.take(table2, tokens2, axis=0)
    assert out2.shape == (B2, T2, E2)
    assert jnp.allclose(out2, ref2, rtol=0.0, atol=1e-6), "gather path mismatch"

    print("KERNEL_OK")
</pallas_src>

<mosaic_0001>
module attributes {stable_mosaic.version = 11 : i64} {
  func.func @_onehot_embed_kernel(%arg0: i32, %arg1: memref<8x1xi32, #tpu.memory_space<vmem>>, %arg2: memref<64x128xf32, #tpu.memory_space<vmem>>, %arg3: memref<8x128xf32, #tpu.memory_space<vmem>>) attributes {dimension_semantics = [#tpu.dimension_semantics<parallel>], iteration_bounds = array<i64: 2>, scalar_prefetch = 0 : i64, scratch_operands = 0 : i64, tpu.core_type = #tpu.core_type<tc>, window_params = [{transform_indices = @transform_0, window_bounds = array<i64: 8, 1>}, {pipeline_mode = #tpu.pipeline_mode<synchronous>, transform_indices = @transform_1, window_bounds = array<i64: 64, 128>}, {transform_indices = @transform_2, window_bounds = array<i64: 8, 128>}]} {
    %c0 = arith.constant 0 : index
    %c0_0 = arith.constant 0 : index
    %0 = vector.load %arg1[%c0, %c0_0] : memref<8x1xi32, #tpu.memory_space<vmem>>, vector<8x1xi32>
    %1 = tpu.iota {dimensions = array<i32: 1>} : vector<8x64xi32>
    %2 = vector.broadcast %0 : vector<8x1xi32> to vector<8x64xi32>
    %3 = arith.cmpi eq, %2, %1 : vector<8x64xi32>
    %4 = arith.extui %3 : vector<8x64xi1> to vector<8x64xi32>
    %5 = arith.sitofp %4 : vector<8x64xi32> to vector<8x64xf32>
    %c0_1 = arith.constant 0 : index
    %c0_2 = arith.constant 0 : index
    %6 = vector.load %arg2[%c0_1, %c0_2] : memref<64x128xf32, #tpu.memory_space<vmem>>, vector<64x128xf32>
    %cst = arith.constant dense<0.000000e+00> : vector<8x128xf32>
    %7 = tpu.matmul %5, %6, %cst {dimension_numbers = #tpu.dot_dimension_numbers<[1], [0], [0], [1], [0, 0, 1, 1], [], []>, precision = #tpu.contract_precision<fp32>} : vector<8x64xf32>, vector<64x128xf32>, vector<8x128xf32> -> vector<8x128xf32>
    %c0_3 = arith.constant 0 : index
    %c0_4 = arith.constant 0 : index
    %8 = vector.load %arg3[%c0_3, %c0_4] : memref<8x128xf32, #tpu.memory_space<vmem>>, vector<8x128xf32>
    tpu.vector_store %arg3[%c0_3, %c0_4], %7 {strides = array<i32>} : memref<8x128xf32, #tpu.memory_space<vmem>>, vector<8x128xf32>,
    return
  }
  func.func @transform_0(%arg0: i32) -> (i32, i32) {
    %c0_i32 = arith.constant 0 : i32
    %c0_i32_0 = arith.constant 0 : i32
    return %arg0, %c0_i32 : i32, i32
  }
  func.func @transform_1(%arg0: i32) -> (i32, i32) {
    %c0_i32 = arith.constant 0 : i32
    %c0_i32_0 = arith.constant 0 : i32
    %c0_i32_1 = arith.constant 0 : i32
    return %c0_i32, %c0_i32_0 : i32, i32
  }
  func.func @transform_2(%arg0: i32) -> (i32, i32) {
    %c0_i32 = arith.constant 0 : i32
    %c0_i32_0 = arith.constant 0 : i32
    return %arg0, %c0_i32 : i32, i32
  }
}

</mosaic_0001>

<llo_original>
// kernel: tpu_custom_call.1
$region0: #{tpu_custom_call.1}
  #allocation0 [shape = 'u32[]', space=smem, size = 0x4, offset = 0x4, fixed_abs, tag = 'smem constant byte address 0x4 - core index']
  #allocation1 [shape = 'u32[144,128]{1,0:T(1,128)}', space=vmem, size = 0x12000, scoped, tag = 'internal scratch']
  %s0 = inlined_call_operand.vmem [shape: s32[16,1], index: 0, kind: input, shape index: {}]
  %s1 = inlined_call_operand.hbm [shape: f32[64,128], index: 1, kind: input, shape index: {}]
  %s2 = inlined_call_operand.hbm [shape: f32[16,128], index: 2, kind: output, shape index: {}]
  %s3 = sld [smem:[#allocation0]]
  $region45: #{tpu_custom_call.1} parent=0
    _
  %s5 = ssub.s32 1, %s3
  %s6 = scalar_select 0, %s5, %s3
  $region1: #{tpu_custom_call.1} parent=0
    #allocation2 [shape = 'u8[32768]{0}', space=vmem, size = 0x8000, scoped, tag = 'input window, operand 1, single buffered']
    #allocation3 [shape = 's32[2]{0}', space=sflag, size = 0x8, scoped, tag = 'scoped memory for tpu_custom_call.1']
    #allocation4 [shape = 's32[2]{0}', space=sflag, size = 0x8, scoped, tag = 'scoped memory for tpu_custom_call.1']
    #allocation5 [shape = 'u8[8192]{0}', space=vmem, size = 0x2000, scoped, tag = 'output window, operand 0']
    %7 = vsyncpa [#allocation3], 0
    %8 = vsyncpa [#allocation4], 0
    %s9 = scalar_lea.sflag [#allocation4], 1
    %10 = vsyncpa %s9, 0
    loop: start=0, step=1, limit=4
    $region2: #{tpu_custom_call.1} parent=1 // loop_pre_header
      _
    $region3: #{tpu_custom_call.1} parent=1 // loop_header
      %s12 = sphi 0, %s16
      %p13 = scmp.ge.s32.totalorder %s12, 4
      %s22 = sphi 0, %s24
      %s25 = sphi 0, %s22
      %s26 = sphi 0, %s25
      %s42 = sphi 0, %s26
      %s46 = sphi 0, %s46
      %s48 = sphi 0, %s46
      %s49 = sphi 0, %s48
      %s63 = sphi 0, %s49
      %s69 = sphi 0, %s71
      %s72 = sphi 0, %s69
      %s73 = sphi 0, %s72
      %s89 = sphi 0, %s73
    $region4: #{tpu_custom_call.1} parent=1 // loop_header_branch
      %15 = sbr.rel (%p13) target = $region8
    $region5: #{tpu_custom_call.1} parent=1 // loop_body
      %s17 = ssub.s32 %s12, 1
      %s18 = ssub.s32 %s12, 2
      %s19 = sadd.s32 %s12, 1
      %s20 = ssub.s32 %s12, %s19
      %p21 = scmp.eq.s32.totalorder %s20, 0
      %s23 = sadd.s32 %s22, 1
      %s24 = scalar_select %p21, %s22, %s23
      %p27 = pneg %p21
      %p28 = scmp.eq.s32.totalorder %s12, 1
      %p29 = por %p27, %p28
      %p30 = scmp.ne.s32.totalorder %s22, %s25
      %p31 = scmp.eq.s32.totalorder %s12, 0
      %p32 = por %p30, %p31
      %p33 = scmp.ne.s32.totalorder %s22, %s25
      %p34 = scmp.eq.s32.totalorder %s17, 1
      %p35 = por %p33, %p34
      %p36 = scmp.ne.s32.totalorder %s25, %s26
      %p37 = scmp.eq.s32.totalorder %s17, 0
      %p38 = por %p36, %p37
      %p39 = scmp.ne.s32.totalorder %s25, %s26
      %p40 = scmp.eq.s32.totalorder %s18, 1
      %p41 = por %p39, %p40
      %p43 = scmp.ne.s32.totalorder %s26, %s42
      %p44 = scmp.eq.s32.totalorder %s18, 0
      %p45 = por %p43, %p44
      %s47 = sadd.s32 %s46, 1
      %p50 = scmp.eq.s32.totalorder %s12, 1
      %p51 = scmp.ne.s32.totalorder %s46, %s48
      %p52 = scmp.eq.s32.totalorder %s12, 0
      %p53 = por %p51, %p52
      %p54 = scmp.ne.s32.totalorder %s46, %s48
      %p55 = scmp.eq.s32.totalorder %s17, 1
      %p56 = por %p54, %p55
      %p57 = scmp.ne.s32.totalorder %s48, %s49
      %p58 = scmp.eq.s32.totalorder %s17, 0
      %p59 = por %p57, %p58
      %p60 = scmp.ne.s32.totalorder %s48, %s49
      %p61 = scmp.eq.s32.totalorder %s18, 1
      %p62 = por %p60, %p61
      %p64 = scmp.ne.s32.totalorder %s49, %s63
      %p65 = scmp.eq.s32.totalorder %s18, 0
      %p66 = por %p64, %p65
      %s67 = ssub.s32 %s12, %s19
      %p68 = scmp.eq.s32.totalorder %s67, 0
      %s70 = sadd.s32 %s69, 1
      %s71 = scalar_select %p68, %s69, %s70
      %p74 = pneg %p68
      %p75 = scmp.eq.s32.totalorder %s12, 1
      %p76 = por %p74, %p75
      %p77 = scmp.ne.s32.totalorder %s69, %s72
      %p78 = scmp.eq.s32.totalorder %s12, 0
      %p79 = por %p77, %p78
      %p80 = scmp.ne.s32.totalorder %s69, %s72
      %p81 = scmp.eq.s32.totalorder %s17, 1
      %p82 = por %p80, %p81
      %p83 = scmp.ne.s32.totalorder %s72, %s73
      %p84 = scmp.eq.s32.totalorder %s17, 0
      %p85 = por %p83, %p84
      %p86 = scmp.ne.s32.totalorder %s72, %s73
      %p87 = scmp.eq.s32.totalorder %s18, 1
      %p88 = por %p86, %p87
      %p90 = scmp.ne.s32.totalorder %s73, %s89
      %p91 = scmp.eq.s32.totalorder %s18, 0
      %p92 = por %p90, %p91
      %p93 = scmp.le.s32.totalorder 1, %s12
      %p94 = scmp.lt.s32.totalorder %s12, 3
      %p95 = pnand %p93, %p94
      %p96 = pneg %p95
      // Predicated region
      $region9: #{tpu_custom_call.1} parent=5 // pred_check
        _
      $region10: #{tpu_custom_call.1} parent=5 // pred_check_branch
        %98 = sbr.rel (%p95) target = $region12
      $region11: #{tpu_custom_call.1} parent=5 // pred_region
        %s99 = ssub.s32 %s12, 1
        // Predicated region
        $region13: #{tpu_custom_call.1} parent=11 // pred_check
          %p100 = pneg %p59
        $region14: #{tpu_custom_call.1} parent=11 // pred_check_branch
          %102 = sbr.rel (%p100) target = $region16
        $region15: #{tpu_custom_call.1} parent=11 // pred_region
          %s104 = ssub.s32 1024, 1024
          %105 = vsyncadd [#allocation3], %s104
          %s106 = sshll.u32 [#allocation2], 4
          %s107 = int_to_ptr.vmem [resolvable:$true] %s106
          %112 = dma.hbm_to_vmem [thread:$0]  %s1, 1024, %s107, [#allocation3], 128, 128, 8
        $region16: #{tpu_custom_call.1} parent=11 // pred_fallthru
          _
      $region12: #{tpu_custom_call.1} parent=5 // pred_fallthru
        _
      %p113 = scmp.lt.s32.totalorder %s12, 2
      // Predicated region
      $region17: #{tpu_custom_call.1} parent=5 // pred_check
        %p114 = pneg %p113
      $region18: #{tpu_custom_call.1} parent=5 // pred_check_branch
        %116 = sbr.rel (%p114) target = $region20
      $region19: #{tpu_custom_call.1} parent=5 // pred_region
        // Predicated region
        $region21: #{tpu_custom_call.1} parent=19 // pred_check
          %p117 = pneg %p32
        $region22: #{tpu_custom_call.1} parent=19 // pred_check_branch
          %119 = sbr.rel (%p117) target = $region24
        $region23: #{tpu_custom_call.1} parent=19 // pred_region
          %p120 = scmp.lt.s32.totalorder %s12, 1
          %s121 = scalar_select %p120, %s12, 1
          %s122 = smul.addr %s121, 8
          %s123 = scalar_lea.vmem %s0, %s122
        $region24: #{tpu_custom_call.1} parent=19 // pred_fallthru
          _
      $region20: #{tpu_custom_call.1} parent=5 // pred_fallthru
        _
      %p124 = scmp.le.s32.totalorder 1, %s12
      %p125 = scmp.lt.s32.totalorder %s12, 3
      %p126 = pnand %p124, %p125
      %p127 = pneg %p126
      // Predicated region
      $region25: #{tpu_custom_call.1} parent=5 // pred_check
        _
      $region26: #{tpu_custom_call.1} parent=5 // pred_check_branch
        %129 = sbr.rel (%p126) target = $region28
      $region27: #{tpu_custom_call.1} parent=5 // pred_region
        %s130 = ssub.s32 %s12, 1
        // Predicated region
        $region29: #{tpu_custom_call.1} parent=27 // pred_check
          %p131 = pneg %p59
        $region30: #{tpu_custom_call.1} parent=27 // pred_check_branch
          %133 = sbr.rel (%p131) target = $region32
        $region31: #{tpu_custom_call.1} parent=27 // pred_region
          %134 = dma.done [#allocation3], 1024
        $region32: #{tpu_custom_call.1} parent=27 // pred_fallthru
          _
        %p135 = scmp.lt.s32.totalorder %s17, 1
        %s136 = scalar_select %p135, %s17, 1
        %s137 = smul.addr %s136, 8
        %s138 = scalar_lea.vmem %s0, %s137
        %p139 = pneg %p38
        %p140 = pneg %p35
        %p141 = pneg %p59
        %p142 = pneg %p56
        %p143 = pneg %p85
        %p144 = pneg %p82
        %s145 = sand.u32 %s72, 1
        %s146 = scalar_lea.sflag [#allocation4], %s145
        %s147 = sand.u32 %s72, 1
        %s148 = smul.addr %s147, 8
        %s149 = scalar_lea.vmem [#allocation5], %s148
        %p150 = scmp.lt.s32.totalorder %s17, 1
        %s151 = scalar_select %p150, %s17, 1
        %s152 = smul.addr %s151, 8
        %s153 = scalar_lea.vmem %s0, %s152
        %v154 = vld [vmem:[%s153] sm:$0xff]
        %v155 = vlaneseq
        %v156 = vand.u32 %v155, 127
        %157 = vset.pattern.permute.xlu0 0
        %158 = vperm.xlu0 %157, %v154
        %v159 = vpop.permute.xlu0 %158
        %vm160 = vcmp.eq.s32.totalorder %v159, %v156
        %v161 = vsel %vm160, 1, 0
        %v162 = vcvt.s32.f32 %v161
        %v163 = vld [vmem:[#allocation2] sm:$0xff]
        %v164 = vld [vmem:[#allocation2 + $0x8] sm:$0xff]
        %v165 = vld [vmem:[#allocation2 + $0x10] sm:$0xff]
        %v166 = vld [vmem:[#allocation2 + $0x18] sm:$0xff]
        %v167 = vld [vmem:[#allocation2 + $0x20] sm:$0xff]
        %v168 = vld [vmem:[#allocation2 + $0x28] sm:$0xff]
        %v169 = vld [vmem:[#allocation2 + $0x30] sm:$0xff]
        %v170 = vld [vmem:[#allocation2 + $0x38] sm:$0xff]
        %vm171 = vcmask 523264
        %v173 = vsel %vm171, %v162, 0
        %175 = vmatprep.subr.mxu0 0.0
        %v176 = vand.u32 %v163, 4294901760
        %177 = vmatpush1.msra.mxu0 %v176
        %178 = vmatprep.subr.mxu0 0.0
        %v179 = vand.u32 %v164, 4294901760
        %180 = vmatpush1.msra.mxu0 %v179
        %181 = vmatprep.subr.mxu0 0.0
        %v182 = vand.u32 %v165, 4294901760
        %183 = vmatpush1.msra.mxu0 %v182
        %184 = vmatprep.subr.mxu0 0.0
        %v185 = vand.u32 %v166, 4294901760
        %186 = vmatpush1.msra.mxu0 %v185
        %187 = vmatprep.subr.mxu0 0.0
        %v188 = vand.u32 %v167, 4294901760
        %189 = vmatpush1.msra.mxu0 %v188
        %190 = vmatprep.subr.mxu0 0.0
        %v191 = vand.u32 %v168, 4294901760
        %192 = vmatpush1.msra.mxu0 %v191
        %193 = vmatprep.subr.mxu0 0.0
        %v194 = vand.u32 %v169, 4294901760
        %195 = vmatpush1.msra.mxu0 %v194
        %196 = vmatprep.subr.mxu0 0.0
        %v197 = vand.u32 %v170, 4294901760
        %198 = vmatpush1.msra.mxu0 %v197
        %199 = vmatprep.subr.mxu0 0.0
        %200 = vmatpush1.msra.mxu0 0.0
        %201 = vmatprep.subr.mxu0 0.0
        %202 = vmatpush1.msra.mxu0 0.0
        %203 = vmatprep.subr.mxu0 0.0
        %204 = vmatpush1.msra.mxu0 0.0
        %205 = vmatprep.subr.mxu0 0.0
        %206 = vmatpush1.msra.mxu0 0.0
        %207 = vmatprep.subr.mxu0 0.0
        %208 = vmatpush1.msra.mxu0 0.0
        %209 = vmatprep.subr.mxu0 0.0
        %210 = vmatpush1.msra.mxu0 0.0
        %211 = vmatprep.subr.mxu0 0.0
        %212 = vmatpush1.msra.mxu0 0.0
        %213 = vmatprep.subr.mxu0 0.0
        %214 = vmatpush1.msra.mxu0 0.0
        %215 = vmatprep.subr.mxu0 0.0
        %216 = vmatpush1.msra.mxu0 0.0
        %217 = vmatprep.subr.mxu0 0.0
        %218 = vmatpush1.msra.mxu0 0.0
        %219 = vmatprep.subr.mxu0 0.0
        %220 = vmatpush1.msra.mxu0 0.0
        %221 = vmatprep.subr.mxu0 0.0
        %222 = vmatpush1.msra.mxu0 0.0
        %223 = vmatprep.subr.mxu0 0.0
        %224 = vmatpush1.msra.mxu0 0.0
        %225 = vmatprep.subr.mxu0 0.0
        %226 = vmatpush1.msra.mxu0 0.0
        %227 = vmatprep.subr.mxu0 0.0
        %228 = vmatpush1.msra.mxu0 0.0
        %229 = vmatprep.subr.mxu0 0.0
        %230 = vmatpush1.msra.mxu0 0.0
        %231 = vmatprep.subr.mxu0 0.0
        %232 = vmatpush1.msra.mxu0 0.0
        %233 = vmatprep.subr.mxu0 0.0
        %234 = vmatpush1.msra.mxu0 0.0
        %235 = vmatprep.subr.mxu0 0.0
        %236 = vmatpush1.msra.mxu0 0.0
        %237 = vmatprep.subr.mxu0 0.0
        %238 = vmatpush1.msra.mxu0 0.0
        %239 = vmatprep.subr.mxu0 0.0
        %240 = vmatpush1.msra.mxu0 0.0
        %241 = vmatprep.subr.mxu0 0.0
        %242 = vmatpush1.msra.mxu0 0.0
        %243 = vmatprep.subr.mxu0 0.0
        %244 = vmatpush1.msra.mxu0 0.0
        %245 = vmatprep.subr.mxu0 0.0
        %246 = vmatpush1.msra.mxu0 0.0
        %247 = vmatprep.mubr.f32.mxu0 0.0
        %v248 = vand.u32 %v173, 4294901760
        %v249 = vsub.f32 %v173, %v248
        %v250 = vand.u32 %v249, 4294901760
        %v251 = vsub.f32 %v249, %v250
        %v252 = vand.u32 %v251, 4294901760
        %253 = vmatmul.mubr.f32.gmra.mrb[0].mxu0 %v252
        %v254 = vpop.f32.mrb[0].mxu0
        %v255 = vadd.f32 0.0, %v254
        %v256 = vpop.f32.mrb[0].mxu0
        %257 = vdwg.mxu0
        %258 = vmatprep.subr.mxu0 0.0
        %v259 = vand.u32 %v163, 4294901760
        %v260 = vsub.f32 %v163, %v259
        %v261 = vand.u32 %v260, 4294901760
        %v262 = vsub.f32 %v260, %v261
        %v263 = vand.u32 %v262, 4294901760
        %264 = vmatpush1.msra.mxu0 %v263
        %265 = vmatprep.subr.mxu0 0.0
        %v266 = vand.u32 %v164, 4294901760
        %v267 = vsub.f32 %v164, %v266
        %v268 = vand.u32 %v267, 4294901760
        %v269 = vsub.f32 %v267, %v268
        %v270 = vand.u32 %v269, 4294901760
        %271 = vmatpush1.msra.mxu0 %v270
        %272 = vmatprep.subr.mxu0 0.0
        %v273 = vand.u32 %v165, 4294901760
        %v274 = vsub.f32 %v165, %v273
        %v275 = vand.u32 %v274, 4294901760
        %v276 = vsub.f32 %v274, %v275
        %v277 = vand.u32 %v276, 4294901760
        %278 = vmatpush1.msra.mxu0 %v277
        %279 = vmatprep.subr.mxu0 0.0
        %v280 = vand.u32 %v166, 4294901760
        %v281 = vsub.f32 %v166, %v280
        %v282 = vand.u32 %v281, 4294901760
        %v283 = vsub.f32 %v281, %v282
        %v284 = vand.u32 %v283, 4294901760
        %285 = vmatpush1.msra.mxu0 %v284
        %286 = vmatprep.subr.mxu0 0.0
        %v287 = vand.u32 %v167, 4294901760
        %v288 = vsub.f32 %v167, %v287
        %v289 = vand.u32 %v288, 4294901760
        %v290 = vsub.f32 %v288, %v289
        %v291 = vand.u32 %v290, 4294901760
        %292 = vmatpush1.msra.mxu0 %v291
        %293 = vmatprep.subr.mxu0 0.0
        %v294 = vand.u32 %v168, 4294901760
        %v295 = vsub.f32 %v168, %v294
        %v296 = vand.u32 %v295, 4294901760
        %v297 = vsub.f32 %v295, %v296
        %v298 = vand.u32 %v297, 4294901760
        %299 = vmatpush1.msra.mxu0 %v298
        %300 = vmatprep.subr.mxu0 0.0
        %v301 = vand.u32 %v169, 4294901760
        %v302 = vsub.f32 %v169, %v301
        %v303 = vand.u32 %v302, 4294901760
        %v304 = vsub.f32 %v302, %v303
        %v305 = vand.u32 %v304, 4294901760
        %306 = vmatpush1.msra.mxu0 %v305
        %307 = vmatprep.subr.mxu0 0.0
        %v308 = vand.u32 %v170, 4294901760
        %v309 = vsub.f32 %v170, %v308
        %v310 = vand.u32 %v309, 4294901760
        %v311 = vsub.f32 %v309, %v310
        %v312 = vand.u32 %v311, 4294901760
        %313 = vmatpush1.msra.mxu0 %v312
        %314 = vmatprep.subr.mxu0 0.0
        %315 = vmatpush1.msra.mxu0 0.0
        %316 = vmatprep.subr.mxu0 0.0
        %317 = vmatpush1.msra.mxu0 0.0
        %318 = vmatprep.subr.mxu0 0.0
        %319 = vmatpush1.msra.mxu0 0.0
        %320 = vmatprep.subr.mxu0 0.0
        %321 = vmatpush1.msra.mxu0 0.0
        %322 = vmatprep.subr.mxu0 0.0
        %323 = vmatpush1.msra.mxu0 0.0
        %324 = vmatprep.subr.mxu0 0.0
        %325 = vmatpush1.msra.mxu0 0.0
        %326 = vmatprep.subr.mxu0 0.0
        %327 = vmatpush1.msra.mxu0 0.0
        %328 = vmatprep.subr.mxu0 0.0
        %329 = vmatpush1.msra.mxu0 0.0
        %330 = vmatprep.subr.mxu0 0.0
        %331 = vmatpush1.msra.mxu0 0.0
        %332 = vmatprep.subr.mxu0 0.0
        %333 = vmatpush1.msra.mxu0 0.0
        %334 = vmatprep.subr.mxu0 0.0
        %335 = vmatpush1.msra.mxu0 0.0
        %336 = vmatprep.subr.mxu0 0.0
        %337 = vmatpush1.msra.mxu0 0.0
        %338 = vmatprep.subr.mxu0 0.0
        %339 = vmatpush1.msra.mxu0 0.0
        %340 = vmatprep.subr.mxu0 0.0
        %341 = vmatpush1.msra.mxu0 0.0
        %342 = vmatprep.subr.mxu0 0.0
        %343 = vmatpush1.msra.mxu0 0.0
        %344 = vmatprep.subr.mxu0 0.0
        %345 = vmatpush1.msra.mxu0 0.0
        %346 = vmatprep.subr.mxu0 0.0
        %347 = vmatpush1.msra.mxu0 0.0
        %348 = vmatprep.subr.mxu0 0.0
        %349 = vmatpush1.msra.mxu0 0.0
        %350 = vmatprep.subr.mxu0 0.0
        %351 = vmatpush1.msra.mxu0 0.0
        %352 = vmatprep.subr.mxu0 0.0
        %353 = vmatpush1.msra.mxu0 0.0
        %354 = vmatprep.subr.mxu0 0.0
        %355 = vmatpush1.msra.mxu0 0.0
        %356 = vmatprep.subr.mxu0 0.0
        %357 = vmatpush1.msra.mxu0 0.0
        %358 = vmatprep.subr.mxu0 0.0
        %359 = vmatpush1.msra.mxu0 0.0
        %360 = vmatprep.subr.mxu0 0.0
        %361 = vmatpush1.msra.mxu0 0.0
        %362 = vmatprep.mubr.f32.mxu0 0.0
        %v363 = vand.u32 %v173, 4294901760
        %364 = vmatmul.mubr.f32.gmra.mrb[0].mxu0 %v363
        %v365 = vpop.f32.mrb[0].mxu0
        %v366 = vadd.f32 %v255, %v365
        %v367 = vpop.f32.mrb[0].mxu0
        %368 = vdwg.mxu0
        %369 = vmatprep.subr.mxu0 0.0
        %v370 = vand.u32 %v163, 4294901760
        %v371 = vsub.f32 %v163, %v370
        %372 = vmatpush1.msra.mxu0 %v371
        %373 = vmatprep.subr.mxu0 0.0
        %v374 = vand.u32 %v164, 4294901760
        %v375 = vsub.f32 %v164, %v374
        %376 = vmatpush1.msra.mxu0 %v375
        %377 = vmatprep.subr.mxu0 0.0
        %v378 = vand.u32 %v165, 4294901760
        %v379 = vsub.f32 %v165, %v378
        %380 = vmatpush1.msra.mxu0 %v379
        %381 = vmatprep.subr.mxu0 0.0
        %v382 = vand.u32 %v166, 4294901760
        %v383 = vsub.f32 %v166, %v382
        %384 = vmatpush1.msra.mxu0 %v383
        %385 = vmatprep.subr.mxu0 0.0
        %v386 = vand.u32 %v167, 4294901760
        %v387 = vsub.f32 %v167, %v386
        %388 = vmatpush1.msra.mxu0 %v387
        %389 = vmatprep.subr.mxu0 0.0
        %v390 = vand.u32 %v168, 4294901760
        %v391 = vsub.f32 %v168, %v390
        %392 = vmatpush1.msra.mxu0 %v391
        %393 = vmatprep.subr.mxu0 0.0
        %v394 = vand.u32 %v169, 4294901760
        %v395 = vsub.f32 %v169, %v394
        %396 = vmatpush1.msra.mxu0 %v395
        %397 = vmatprep.subr.mxu0 0.0
        %v398 = vand.u32 %v170, 4294901760
        %v399 = vsub.f32 %v170, %v398
        %400 = vmatpush1.msra.mxu0 %v399
        %401 = vmatprep.subr.mxu0 0.0
        %402 = vmatpush1.msra.mxu0 0.0
        %403 = vmatprep.subr.mxu0 0.0
        %404 = vmatpush1.msra.mxu0 0.0
        %405 = vmatprep.subr.mxu0 0.0
        %406 = vmatpush1.msra.mxu0 0.0
        %407 = vmatprep.subr.mxu0 0.0
        %408 = vmatpush1.msra.mxu0 0.0
        %409 = vmatprep.subr.mxu0 0.0
        %410 = vmatpush1.msra.mxu0 0.0
        %411 = vmatprep.subr.mxu0 0.0
        %412 = vmatpush1.msra.mxu0 0.0
        %413 = vmatprep.subr.mxu0 0.0
        %414 = vmatpush1.msra.mxu0 0.0
        %415 = vmatprep.subr.mxu0 0.0
        %416 = vmatpush1.msra.mxu0 0.0
        %417 = vmatprep.subr.mxu0 0.0
        %418 = vmatpush1.msra.mxu0 0.0
        %419 = vmatprep.subr.mxu0 0.0
        %420 = vmatpush1.msra.mxu0 0.0
        %421 = vmatprep.subr.mxu0 0.0
        %422 = vmatpush1.msra.mxu0 0.0
        %423 = vmatprep.subr.mxu0 0.0
        %424 = vmatpush1.msra.mxu0 0.0
        %425 = vmatprep.subr.mxu0 0.0
        %426 = vmatpush1.msra.mxu0 0.0
        %427 = vmatprep.subr.mxu0 0.0
        %428 = vmatpush1.msra.mxu0 0.0
        %429 = vmatprep.subr.mxu0 0.0
        %430 = vmatpush1.msra.mxu0 0.0
        %431 = vmatprep.subr.mxu0 0.0
        %432 = vmatpush1.msra.mxu0 0.0
        %433 = vmatprep.subr.mxu0 0.0
        %434 = vmatpush1.msra.mxu0 0.0
        %435 = vmatprep.subr.mxu0 0.0
        %436 = vmatpush1.msra.mxu0 0.0
        %437 = vmatprep.subr.mxu0 0.0
        %438 = vmatpush1.msra.mxu0 0.0
        %439 = vmatprep.subr.mxu0 0.0
        %440 = vmatpush1.msra.mxu0 0.0
        %441 = vmatprep.subr.mxu0 0.0
        %442 = vmatpush1.msra.mxu0 0.0
        %443 = vmatprep.subr.mxu0 0.0
        %444 = vmatpush1.msra.mxu0 0.0
        %445 = vmatprep.subr.mxu0 0.0
        %446 = vmatpush1.msra.mxu0 0.0
        %447 = vmatprep.subr.mxu0 0.0
        %448 = vmatpush1.msra.mxu0 0.0
        %449 = vmatprep.mubr.f32.mxu0 0.0
        %v450 = vand.u32 %v173, 4294901760
        %v451 = vsub.f32 %v173, %v450
        %452 = vmatmul.mubr.f32.gmra.mrb[0].mxu0 %v451
        %v453 = vpop.f32.mrb[0].mxu0
        %v454 = vadd.f32 %v366, %v453
        %v455 = vpop.f32.mrb[0].mxu0
        %456 = vdwg.mxu0
        %457 = vmatprep.subr.mxu0 0.0
        %v458 = vand.u32 %v163, 4294901760
        %459 = vmatpush1.msra.mxu0 %v458
        %460 = vmatprep.subr.mxu0 0.0
        %v461 = vand.u32 %v164, 4294901760
        %462 = vmatpush1.msra.mxu0 %v461
        %463 = vmatprep.subr.mxu0 0.0
        %v464 = vand.u32 %v165, 4294901760
        %465 = vmatpush1.msra.mxu0 %v464
        %466 = vmatprep.subr.mxu0 0.0
        %v467 = vand.u32 %v166, 4294901760
        %468 = vmatpush1.msra.mxu0 %v467
        %469 = vmatprep.subr.mxu0 0.0
        %v470 = vand.u32 %v167, 4294901760
        %471 = vmatpush1.msra.mxu0 %v470
        %472 = vmatprep.subr.mxu0 0.0
        %v473 = vand.u32 %v168, 4294901760
        %474 = vmatpush1.msra.mxu0 %v473
        %475 = vmatprep.subr.mxu0 0.0
        %v476 = vand.u32 %v169, 4294901760
        %477 = vmatpush1.msra.mxu0 %v476
        %478 = vmatprep.subr.mxu0 0.0
        %v479 = vand.u32 %v170, 4294901760
        %480 = vmatpush1.msra.mxu0 %v479
        %481 = vmatprep.subr.mxu0 0.0
        %482 = vmatpush1.msra.mxu0 0.0
        %483 = vmatprep.subr.mxu0 0.0
        %484 = vmatpush1.msra.mxu0 0.0
        %485 = vmatprep.subr.mxu0 0.0
        %486 = vmatpush1.msra.mxu0 0.0
        %487 = vmatprep.subr.mxu0 0.0
        %488 = vmatpush1.msra.mxu0 0.0
        %489 = vmatprep.subr.mxu0 0.0
        %490 = vmatpush1.msra.mxu0 0.0
        %491 = vmatprep.subr.mxu0 0.0
        %492 = vmatpush1.msra.mxu0 0.0
        %493 = vmatprep.subr.mxu0 0.0
        %494 = vmatpush1.msra.mxu0 0.0
        %495 = vmatprep.subr.mxu0 0.0
        %496 = vmatpush1.msra.mxu0 0.0
        %497 = vmatprep.subr.mxu0 0.0
        %498 = vmatpush1.msra.mxu0 0.0
        %499 = vmatprep.subr.mxu0 0.0
        %500 = vmatpush1.msra.mxu0 0.0
        %501 = vmatprep.subr.mxu0 0.0
        %502 = vmatpush1.msra.mxu0 0.0
        %503 = vmatprep.subr.mxu0 0.0
        %504 = vmatpush1.msra.mxu0 0.0
        %505 = vmatprep.subr.mxu0 0.0
        %506 = vmatpush1.msra.mxu0 0.0
        %507 = vmatprep.subr.mxu0 0.0
        %508 = vmatpush1.msra.mxu0 0.0
        %509 = vmatprep.subr.mxu0 0.0
        %510 = vmatpush1.msra.mxu0 0.0
        %511 = vmatprep.subr.mxu0 0.0
        %512 = vmatpush1.msra.mxu0 0.0
        %513 = vmatprep.subr.mxu0 0.0
        %514 = vmatpush1.msra.mxu0 0.0
        %515 = vmatprep.subr.mxu0 0.0
        %516 = vmatpush1.msra.mxu0 0.0
        %517 = vmatprep.subr.mxu0 0.0
        %518 = vmatpush1.msra.mxu0 0.0
        %519 = vmatprep.subr.mxu0 0.0
        %520 = vmatpush1.msra.mxu0 0.0
        %521 = vmatprep.subr.mxu0 0.0
        %522 = vmatpush1.msra.mxu0 0.0
        %523 = vmatprep.subr.mxu0 0.0
        %524 = vmatpush1.msra.mxu0 0.0
        %525 = vmatprep.subr.mxu0 0.0
        %526 = vmatpush1.msra.mxu0 0.0
        %527 = vmatprep.subr.mxu0 0.0
        %528 = vmatpush1.msra.mxu0 0.0
        %529 = vmatprep.mubr.f32.mxu0 0.0
        %v530 = vand.u32 %v173, 4294901760
        %v531 = vsub.f32 %v173, %v530
        %v532 = vand.u32 %v531, 4294901760
        %533 = vmatmul.mubr.f32.gmra.mrb[0].mxu0 %v532
        %v534 = vpop.f32.mrb[0].mxu0
        %v535 = vadd.f32 %v454, %v534
        %v536 = vpop.f32.mrb[0].mxu0
        %537 = vdwg.mxu0
        %538 = vmatprep.subr.mxu0 0.0
        %v539 = vand.u32 %v163, 4294901760
        %v540 = vsub.f32 %v163, %v539
        %v541 = vand.u32 %v540, 4294901760
        %542 = vmatpush1.msra.mxu0 %v541
        %543 = vmatprep.subr.mxu0 0.0
        %v544 = vand.u32 %v164, 4294901760
        %v545 = vsub.f32 %v164, %v544
        %v546 = vand.u32 %v545, 4294901760
        %547 = vmatpush1.msra.mxu0 %v546
        %548 = vmatprep.subr.mxu0 0.0
        %v549 = vand.u32 %v165, 4294901760
        %v550 = vsub.f32 %v165, %v549
        %v551 = vand.u32 %v550, 4294901760
        %552 = vmatpush1.msra.mxu0 %v551
        %553 = vmatprep.subr.mxu0 0.0
        %v554 = vand.u32 %v166, 4294901760
        %v555 = vsub.f32 %v166, %v554
        %v556 = vand.u32 %v555, 4294901760
        %557 = vmatpush1.msra.mxu0 %v556
        %558 = vmatprep.subr.mxu0 0.0
        %v559 = vand.u32 %v167, 4294901760
        %v560 = vsub.f32 %v167, %v559
        %v561 = vand.u32 %v560, 4294901760
        %562 = vmatpush1.msra.mxu0 %v561
        %563 = vmatprep.subr.mxu0 0.0
        %v564 = vand.u32 %v168, 4294901760
        %v565 = vsub.f32 %v168, %v564
        %v566 = vand.u32 %v565, 4294901760
        %567 = vmatpush1.msra.mxu0 %v566
        %568 = vmatprep.subr.mxu0 0.0
        %v569 = vand.u32 %v169, 4294901760
        %v570 = vsub.f32 %v169, %v569
        %v571 = vand.u32 %v570, 4294901760
        %572 = vmatpush1.msra.mxu0 %v571
        %573 = vmatprep.subr.mxu0 0.0
        %v574 = vand.u32 %v170, 4294901760
        %v575 = vsub.f32 %v170, %v574
        %v576 = vand.u32 %v575, 4294901760
        %577 = vmatpush1.msra.mxu0 %v576
        %578 = vmatprep.subr.mxu0 0.0
        %579 = vmatpush1.msra.mxu0 0.0
        %580 = vmatprep.subr.mxu0 0.0
        %581 = vmatpush1.msra.mxu0 0.0
        %582 = vmatprep.subr.mxu0 0.0
        %583 = vmatpush1.msra.mxu0 0.0
        %584 = vmatprep.subr.mxu0 0.0
        %585 = vmatpush1.msra.mxu0 0.0
        %586 = vmatprep.subr.mxu0 0.0
        %587 = vmatpush1.msra.mxu0 0.0
        %588 = vmatprep.subr.mxu0 0.0
        %589 = vmatpush1.msra.mxu0 0.0
        %590 = vmatprep.subr.mxu0 0.0
        %591 = vmatpush1.msra.mxu0 0.0
        %592 = vmatprep.subr.mxu0 0.0
        %593 = vmatpush1.msra.mxu0 0.0
        %594 = vmatprep.subr.mxu0 0.0
        %595 = vmatpush1.msra.mxu0 0.0
        %596 = vmatprep.subr.mxu0 0.0
        %597 = vmatpush1.msra.mxu0 0.0
        %598 = vmatprep.subr.mxu0 0.0
        %599 = vmatpush1.msra.mxu0 0.0
        %600 = vmatprep.subr.mxu0 0.0
        %601 = vmatpush1.msra.mxu0 0.0
        %602 = vmatprep.subr.mxu0 0.0
        %603 = vmatpush1.msra.mxu0 0.0
        %604 = vmatprep.subr.mxu0 0.0
        %605 = vmatpush1.msra.mxu0 0.0
        %606 = vmatprep.subr.mxu0 0.0
        %607 = vmatpush1.msra.mxu0 0.0
        %608 = vmatprep.subr.mxu0 0.0
        %609 = vmatpush1.msra.mxu0 0.0
        %610 = vmatprep.subr.mxu0 0.0
        %611 = vmatpush1.msra.mxu0 0.0
        %612 = vmatprep.subr.mxu0 0.0
        %613 = vmatpush1.msra.mxu0 0.0
        %614 = vmatprep.subr.mxu0 0.0
        %615 = vmatpush1.msra.mxu0 0.0
        %616 = vmatprep.subr.mxu0 0.0
        %617 = vmatpush1.msra.mxu0 0.0
        %618 = vmatprep.subr.mxu0 0.0
        %619 = vmatpush1.msra.mxu0 0.0
        %620 = vmatprep.subr.mxu0 0.0
        %621 = vmatpush1.msra.mxu0 0.0
        %622 = vmatprep.subr.mxu0 0.0
        %623 = vmatpush1.msra.mxu0 0.0
        %624 = vmatprep.subr.mxu0 0.0
        %625 = vmatpush1.msra.mxu0 0.0
        %626 = vmatprep.mubr.f32.mxu0 0.0
        %v627 = vand.u32 %v173, 4294901760
        %628 = vmatmul.mubr.f32.gmra.mrb[0].mxu0 %v627
        %v629 = vpop.f32.mrb[0].mxu0
        %v630 = vadd.f32 %v535, %v629
        %v631 = vpop.f32.mrb[0].mxu0
        %632 = vdwg.mxu0
        %633 = vmatprep.subr.mxu0 0.0
        %v634 = vand.u32 %v163, 4294901760
        %635 = vmatpush1.msra.mxu0 %v634
        %636 = vmatprep.subr.mxu0 0.0
        %v637 = vand.u32 %v164, 4294901760
        %638 = vmatpush1.msra.mxu0 %v637
        %639 = vmatprep.subr.mxu0 0.0
        %v640 = vand.u32 %v165, 4294901760
        %641 = vmatpush1.msra.mxu0 %v640
        %642 = vmatprep.subr.mxu0 0.0
        %v643 = vand.u32 %v166, 4294901760
        %644 = vmatpush1.msra.mxu0 %v643
        %645 = vmatprep.subr.mxu0 0.0
        %v646 = vand.u32 %v167, 4294901760
        %647 = vmatpush1.msra.mxu0 %v646
        %648 = vmatprep.subr.mxu0 0.0
        %v649 = vand.u32 %v168, 4294901760
        %650 = vmatpush1.msra.mxu0 %v649
        %651 = vmatprep.subr.mxu0 0.0
        %v652 = vand.u32 %v169, 4294901760
        %653 = vmatpush1.msra.mxu0 %v652
        %654 = vmatprep.subr.mxu0 0.0
        %v655 = vand.u32 %v170, 4294901760
        %656 = vmatpush1.msra.mxu0 %v655
        %657 = vmatprep.subr.mxu0 0.0
        %658 = vmatpush1.msra.mxu0 0.0
        %659 = vmatprep.subr.mxu0 0.0
        %660 = vmatpush1.msra.mxu0 0.0
        %661 = vmatprep.subr.mxu0 0.0
        %662 = vmatpush1.msra.mxu0 0.0
        %663 = vmatprep.subr.mxu0 0.0
        %664 = vmatpush1.msra.mxu0 0.0
        %665 = vmatprep.subr.mxu0 0.0
        %666 = vmatpush1.msra.mxu0 0.0
        %667 = vmatprep.subr.mxu0 0.0
        %668 = vmatpush1.msra.mxu0 0.0
        %669 = vmatprep.subr.mxu0 0.0
        %670 = vmatpush1.msra.mxu0 0.0
        %671 = vmatprep.subr.mxu0 0.0
        %672 = vmatpush1.msra.mxu0 0.0
        %673 = vmatprep.subr.mxu0 0.0
        %674 = vmatpush1.msra.mxu0 0.0
        %675 = vmatprep.subr.mxu0 0.0
        %676 = vmatpush1.msra.mxu0 0.0
        %677 = vmatprep.subr.mxu0 0.0
        %678 = vmatpush1.msra.mxu0 0.0
        %679 = vmatprep.subr.mxu0 0.0
        %680 = vmatpush1.msra.mxu0 0.0
        %681 = vmatprep.subr.mxu0 0.0
        %682 = vmatpush1.msra.mxu0 0.0
        %683 = vmatprep.subr.mxu0 0.0
        %684 = vmatpush1.msra.mxu0 0.0
        %685 = vmatprep.subr.mxu0 0.0
        %686 = vmatpush1.msra.mxu0 0.0
        %687 = vmatprep.subr.mxu0 0.0
        %688 = vmatpush1.msra.mxu0 0.0
        %689 = vmatprep.subr.mxu0 0.0
        %690 = vmatpush1.msra.mxu0 0.0
        %691 = vmatprep.subr.mxu0 0.0
        %692 = vmatpush1.msra.mxu0 0.0
        %693 = vmatprep.subr.mxu0 0.0
        %694 = vmatpush1.msra.mxu0 0.0
        %695 = vmatprep.subr.mxu0 0.0
        %696 = vmatpush1.msra.mxu0 0.0
        %697 = vmatprep.subr.mxu0 0.0
        %698 = vmatpush1.msra.mxu0 0.0
        %699 = vmatprep.subr.mxu0 0.0
        %700 = vmatpush1.msra.mxu0 0.0
        %701 = vmatprep.subr.mxu0 0.0
        %702 = vmatpush1.msra.mxu0 0.0
        %703 = vmatprep.subr.mxu0 0.0
        %704 = vmatpush1.msra.mxu0 0.0
        %705 = vmatprep.mubr.f32.mxu0 0.0
        %v706 = vand.u32 %v173, 4294901760
        %707 = vmatmul.mubr.f32.gmra.mrb[0].mxu0 %v706
        %v708 = vpop.f32.mrb[0].mxu0
        %v709 = vadd.f32 %v630, %v708
        %v710 = vpop.f32.mrb[0].mxu0
        %711 = vdwg.mxu0
        %712 = vst [vmem:[%s149] sm:$0xff] %v709
        %s713 = sand.u32 %s72, 1
        %s714 = scalar_lea.sflag [#allocation4], %s713
        %s715 = sand.u32 %s72, 1
        %s716 = smul.addr %s715, 8
        %s717 = scalar_lea.vmem [#allocation5], %s716
        // Predicated region
        $region33: #{tpu_custom_call.1} parent=27 // pred_check
          %p718 = pneg %p82
        $region34: #{tpu_custom_call.1} parent=27 // pred_check_branch
          %720 = sbr.rel (%p718) target = $region36
        $region35: #{tpu_custom_call.1} parent=27 // pred_region
          %s722 = ssub.s32 128, 128
          %723 = vsyncadd %s714, %s722
          %s724 = smul.addr %s17, 128
          %s725 = scalar_lea.hbm %s2, %s724
          %s727 = sshll.u32 %s717, 4
          %s728 = int_to_ptr.vmem [resolvable:$true] %s727
          %730 = dma.vmem_to_hbm [thread:$0]  %s728, 128, %s725, %s714
        $region36: #{tpu_custom_call.1} parent=27 // pred_fallthru
          _
      $region28: #{tpu_custom_call.1} parent=5 // pred_fallthru
        _
      %p731 = scmp.le.s32.totalorder 2, %s12
      // Predicated region
      $region37: #{tpu_custom_call.1} parent=5 // pred_check
        %p732 = pneg %p731
      $region38: #{tpu_custom_call.1} parent=5 // pred_check_branch
        %734 = sbr.rel (%p732) target = $region40
      $region39: #{tpu_custom_call.1} parent=5 // pred_region
        %s735 = ssub.s32 %s12, 2
        // Predicated region
        $region41: #{tpu_custom_call.1} parent=39 // pred_check
          %p736 = pneg %p88
        $region42: #{tpu_custom_call.1} parent=39 // pred_check_branch
          %738 = sbr.rel (%p736) target = $region44
        $region43: #{tpu_custom_call.1} parent=39 // pred_region
          %s739 = sand.u32 %s73, 1
          %s740 = scalar_lea.sflag [#allocation4], %s739
          %s741 = sand.u32 %s73, 1
          %s742 = smul.addr %s741, 8
          %s743 = scalar_lea.vmem [#allocation5], %s742
          %744 = dma.done %s740, 128
        $region44: #{tpu_custom_call.1} parent=39 // pred_fallthru
          _
      $region40: #{tpu_custom_call.1} parent=5 // pred_fallthru
        _
    $region6: #{tpu_custom_call.1} parent=1 // loop_footer
      %s16 = sadd.s32 1, %s12
    $region7: #{tpu_custom_call.1} parent=1 // loop_footer_branch
      %11 = sbr.rel target = $region3
    $region8: #{tpu_custom_call.1} parent=1 // loop_exit
      _
    %745 = vsyncpa [#allocation3], 1
    %s746 = scalar_lea.sflag [#allocation3], 1
    %747 = vsyncpa %s746, 1
    %748 = vsyncpa [#allocation4], 1
    %s749 = scalar_lea.sflag [#allocation4], 1
    %750 = vsyncpa %s749, 1

</llo_original>
